<compile_context>
chip_gen: v6e
topology: v6e:2x2x1
jax: 0.10.0
libtpu: 0.0.40
codegen_flags: <defaults>
</compile_context>

<pallas_src>
import functools
import math

import jax
import jax.numpy as jnp
from jax.experimental import pallas as pl
from jax.experimental.pallas import tpu as pltpu


def _cdiv(a: int, b: int) -> int:
    return -(-a // b)


def _make_band_kernel(r_loop: int, nww: int, ws: int, C: int, block_rows: int, W: int):
    """Kernel copying one band of `r_loop` window-rows into the cropped output slab.

    w_ref: (1, r_in, nww*ws, ws*C)  -- the window-rows of this band (window cols merged
                                       into the sublane axis, channels into the lane axis).
    o_ref: (1, block_rows, W*C)     -- the matching output row slab (already W-cropped).
    """
    wsc = ws * C          # lane width contributed by one window
    wc = W * C            # valid (cropped) lane width of the output

    def kernel(w_ref, o_ref):
        # Lane-axis concatenation of windows: every slice bound below is a Python int,
        # so each store is a static VMEM block copy (no gather, no dynamic indexing).
        # TODO(synk): when (ws*C) % 128 != 0 the lane offsets fall mid-vreg and stores are
        # masked; real ViT channel counts (multiples of 128) are aligned, so we accept the
        # masked stores for tiny-C cases instead of padding C.
        for r in range(r_loop):
            row0 = r * ws
            if row0 >= block_rows:
                break
            rows = min(ws, block_rows - row0)       # clip rows to the block's H extent
            for j in range(nww):
                lane0 = j * wsc
                if lane0 >= wc:
                    break                           # window column fully cropped away
                width = min(wsc, wc - lane0)        # clip boundary window to the W crop
                o_ref[0, row0:row0 + rows, lane0:lane0 + width] = \
                    w_ref[0, r, j * ws:j * ws + rows, :width]

    return kernel


def _reference(windows, *, window_size, pad_hw, hw):
    """Pure-JAX reference mirroring the PyTorch forward exactly."""
    Hp, Wp = pad_hw
    H, W = hw
    ws = window_size
    B = windows.shape[0] // (Hp * Wp // ws // ws)
    x = windows.reshape(B, Hp // ws, Wp // ws, ws, ws, -1)
    x = jnp.transpose(x, (0, 1, 3, 2, 4, 5)).reshape(B, Hp, Wp, -1)
    if Hp > H or Wp > W:
        x = x[:, :H, :W, :]
    return x


@functools.partial(jax.jit, static_argnames=("window_size", "pad_hw", "hw", "band_rows"))
def window_unpartition(windows, *, window_size, pad_hw, hw, band_rows=None):
    """windows: [B*num_windows, ws, ws, C]  ->  [B, H, W, C]

    band_rows: optional tuning/testing hint for the number of window-rows per grid step.
    """
    Hp, Wp = pad_hw
    H, W = hw
    ws = window_size
    assert Hp % ws == 0 and Wp % ws == 0, "pad_hw must be a multiple of window_size"
    assert H <= Hp and W <= Wp, "hw must not exceed pad_hw"

    nwh, nww = Hp // ws, Wp // ws
    num_windows = nwh * nww
    Bnw, ws0, ws1, C = windows.shape
    assert ws0 == ws and ws1 == ws, "window dims must equal window_size"
    assert Bnw % num_windows == 0, "leading dim must be B * num_windows"
    B = Bnw // num_windows

    itemsize = jnp.dtype(windows.dtype).itemsize
    pack = max(1, 4 // itemsize)            # sublane packing: 1 (f32), 2 (bf16), 4 (i8)
    sub_align = 8 * pack
    nwh_out = _cdiv(H, ws)                  # window-rows that survive the H crop

    # Per-chip VMEM budget: ~75% of physical (v7x 64 MiB -> ~48 MiB, v5e/v6e 128 -> ~96 MiB).
    try:
        cap = int(pltpu.get_tpu_info().vmem_capacity_bytes)
    except Exception:
        cap = 64 * 2 ** 20                  # conservative fallback (v7x-sized)
    budget = int(cap * 0.75)

    # ---- band-size selection: R window-rows per grid step -------------------------------
    # R must keep the output block's sublane extent (R*ws) a multiple of the alignment,
    # unless a single band covers all rows (then the block spans the full H dim).
    r_align = sub_align // math.gcd(sub_align, ws)          # lcm(8*pack, ws) / ws
    r_cover = _cdiv(nwh_out, r_align) * r_align              # aligned R covering all rows

    def _block_bytes(r):
        r_in = min(r, nwh_out)
        rows_out = H if r >= nwh_out else r * ws
        in_b = r_in * (nww * ws) * (ws * C) * itemsize
        out_b = rows_out * W * C * itemsize
        return in_b, out_b

    TARGET_OUT = 1 << 20                     # aim for ~1 MiB output bands
    headroom = int(budget * 0.7)             # double-buffered blocks must fit w/ headroom

    cands = list(range(r_align, r_cover, r_align)) + [r_cover]
    fitting = [r for r in cands if 2 * sum(_block_bytes(r)) <= headroom] or [r_align]
    # Prefer band sizes whose last *input* block never reads past the nwh axis
    # (single band, or the bands tile nwh_out within the padded nwh extent).
    in_bounds = [r for r in fitting if r >= nwh_out or _cdiv(nwh_out, r) * r <= nwh]
    pool = in_bounds or fitting
    if band_rows is not None:
        R = min(pool, key=lambda r: abs(r - band_rows))
    else:
        meets = [r for r in pool if _block_bytes(r)[1] >= TARGET_OUT]
        R = min(meets) if meets else max(pool)

    r_in = min(R, nwh_out)                   # window-rows actually read per band
    single_band = R >= nwh_out
    block_rows = H if single_band else R * ws
    nbands = 1 if single_band else _cdiv(nwh_out, R)
    in_bytes, out_bytes = _block_bytes(R)

    # ---- specs ---------------------------------------------------------------------------
    # Free (row-major) reshape: window columns merged into the sublane axis,
    # channels merged into the lane axis.
    w4 = windows.reshape(B, nwh, nww * ws, ws * C)

    # Input band: last two dims are the full array dims -> no tiling constraint.
    in_spec = pl.BlockSpec((1, r_in, nww * ws, ws * C), lambda b, i: (b, i, 0, 0))
    # Output band: lane dim = full W*C (lane-dense stores); sublane dim is either the
    # full H (single band) or a sublane-aligned R*ws; the final H block is partial and
    # Pallas drops the rows beyond H (fused crop).
    out_spec = pl.BlockSpec((1, block_rows, W * C), lambda b, i: (b, i, 0))

    needed = 2 * (in_bytes + out_bytes)      # double-buffered in + out blocks
    vmem_limit = min(budget, max(32 * 2 ** 20, 2 * needed))
    vmem_limit = int(min(max(vmem_limit, needed + (2 << 20)), cap))

    cost = pl.CostEstimate(
        flops=0,
        transcendentals=0,
        bytes_accessed=int(B * nbands * in_bytes + B * H * W * C * itemsize),
    )

    out_flat = pl.pallas_call(
        _make_band_kernel(r_in, nww, ws, C, block_rows, W),
        out_shape=jax.ShapeDtypeStruct((B, H, W * C), windows.dtype),
        grid=(B, nbands),
        in_specs=[in_spec],
        out_specs=out_spec,
        compiler_params=pltpu.CompilerParams(
            # TODO(synk): try pltpu.CORE_PARALLEL on the leading axis to shard the copy
            # across v7x's 2 TensorCores once that path is validated on 1-TC chips.
            dimension_semantics=("parallel", "parallel"),
            vmem_limit_bytes=vmem_limit,
        ),
        cost_estimate=cost,
    )(w4)

    # Free reshape back to channels-last 4-D (splits the lane-flattened W*C).
    return out_flat.reshape(B, H, W, C)


if __name__ == "__main__":
    key = jax.random.PRNGKey(0)

    configs = [
        # (window_size, pad_hw, hw, B, C, dtype, band_rows)
        (8,  (16, 16), (13, 14), 2, 32, jnp.float32,  None),  # crop in H and W
        (8,  (16, 16), (16, 16), 2, 16, jnp.float32,  None),  # no padding, exact blocks
        (8,  (16, 16), (13, 14), 2, 32, jnp.bfloat16, None),  # bf16 (sublane packing = 2)
        (14, (28, 28), (25, 26), 1, 32, jnp.float32,  None),  # ws=14 (ViT-style), crop
        (14, (28, 28), (25, 26), 2, 64, jnp.bfloat16, None),  # ws=14 bf16
        (8,  (32, 16), (29, 14), 1, 32, jnp.float32,  1),     # forces the multi-band path
    ]

    for ws, pad_hw, hw, B, C, dtype, band_rows in configs:
        Hp, Wp = pad_hw
        num_windows = (Hp // ws) * (Wp // ws)
        key, sub = jax.random.split(key)
        windows = jax.random.normal(
            sub, (B * num_windows, ws, ws, C), dtype=jnp.float32
        ).astype(dtype)

        out = window_unpartition(
            windows, window_size=ws, pad_hw=pad_hw, hw=hw, band_rows=band_rows
        )
        out = jax.block_until_ready(out)

        ref = _reference(windows, window_size=ws, pad_hw=pad_hw, hw=hw)
        assert out.shape == (B, hw[0], hw[1], C), out.shape
        assert out.dtype == windows.dtype
        assert jnp.array_equal(out, ref), f"mismatch ws={ws} dtype={dtype} band={band_rows}"

    print("KERNEL_OK")
</pallas_src>

<mosaic_0001>
module attributes {stable_mosaic.version = 11 : i64} {
  func.func @kernel(%arg0: i32, %arg1: i32, %arg2: memref<1x2x16x256xf32, #tpu.memory_space<vmem>>, %arg3: memref<1x13x448xf32, #tpu.memory_space<vmem>>) attributes {dimension_semantics = [#tpu.dimension_semantics<parallel>, #tpu.dimension_semantics<parallel>], iteration_bounds = array<i64: 2, 1>, scalar_prefetch = 0 : i64, scratch_operands = 0 : i64, tpu.core_type = #tpu.core_type<tc>, window_params = [{transform_indices = @transform_0, window_bounds = array<i64: 1, 2, 16, 256>}, {transform_indices = @transform_1, window_bounds = array<i64: 1, 13, 448>}]} {
    %c0 = arith.constant 0 : index
    %c0_0 = arith.constant 0 : index
    %c0_1 = arith.constant 0 : index
    %c0_2 = arith.constant 0 : index
    %0 = vector.load %arg2[%c0, %c0_0, %c0_1, %c0_2] : memref<1x2x16x256xf32, #tpu.memory_space<vmem>>, vector<1x1x8x256xf32>
    %1 = vector.shape_cast %0 : vector<1x1x8x256xf32> to vector<8x256xf32>
    %c0_3 = arith.constant 0 : index
    %c0_4 = arith.constant 0 : index
    %c0_5 = arith.constant 0 : index
    %2 = vector.load %arg3[%c0_3, %c0_4, %c0_5] : memref<1x13x448xf32, #tpu.memory_space<vmem>>, vector<1x8x256xf32>
    %3 = vector.shape_cast %2 : vector<1x8x256xf32> to vector<8x256xf32>
    %4 = vector.shape_cast %1 : vector<8x256xf32> to vector<1x8x256xf32>
    tpu.vector_store %arg3[%c0_3, %c0_4, %c0_5], %4 {strides = array<i32>} : memref<1x13x448xf32, #tpu.memory_space<vmem>>, vector<1x8x256xf32>,
    %c0_6 = arith.constant 0 : index
    %c0_7 = arith.constant 0 : index
    %c8 = arith.constant 8 : index
    %c0_8 = arith.constant 0 : index
    %5 = vector.load %arg2[%c0_6, %c0_7, %c8, %c0_8] : memref<1x2x16x256xf32, #tpu.memory_space<vmem>>, vector<1x1x8x192xf32>
    %6 = vector.shape_cast %5 : vector<1x1x8x192xf32> to vector<8x192xf32>
    %c0_9 = arith.constant 0 : index
    %c0_10 = arith.constant 0 : index
    %c256 = arith.constant 256 : index
    %7 = vector.load %arg3[%c0_9, %c0_10, %c256] : memref<1x13x448xf32, #tpu.memory_space<vmem>>, vector<1x8x192xf32>
    %8 = vector.shape_cast %7 : vector<1x8x192xf32> to vector<8x192xf32>
    %9 = vector.shape_cast %6 : vector<8x192xf32> to vector<1x8x192xf32>
    tpu.vector_store %arg3[%c0_9, %c0_10, %c256], %9 {strides = array<i32>} : memref<1x13x448xf32, #tpu.memory_space<vmem>>, vector<1x8x192xf32>,
    %c0_11 = arith.constant 0 : index
    %c1 = arith.constant 1 : index
    %c0_12 = arith.constant 0 : index
    %c0_13 = arith.constant 0 : index
    %10 = vector.load %arg2[%c0_11, %c1, %c0_12, %c0_13] : memref<1x2x16x256xf32, #tpu.memory_space<vmem>>, vector<1x1x5x256xf32>
    %11 = vector.shape_cast %10 : vector<1x1x5x256xf32> to vector<5x256xf32>
    %c0_14 = arith.constant 0 : index
    %c8_15 = arith.constant 8 : index
    %c0_16 = arith.constant 0 : index
    %12 = vector.load %arg3[%c0_14, %c8_15, %c0_16] : memref<1x13x448xf32, #tpu.memory_space<vmem>>, vector<1x5x256xf32>
    %13 = vector.shape_cast %12 : vector<1x5x256xf32> to vector<5x256xf32>
    %14 = vector.shape_cast %11 : vector<5x256xf32> to vector<1x5x256xf32>
    tpu.vector_store %arg3[%c0_14, %c8_15, %c0_16], %14 {strides = array<i32>} : memref<1x13x448xf32, #tpu.memory_space<vmem>>, vector<1x5x256xf32>,
    %c0_17 = arith.constant 0 : index
    %c1_18 = arith.constant 1 : index
    %c8_19 = arith.constant 8 : index
    %c0_20 = arith.constant 0 : index
    %15 = vector.load %arg2[%c0_17, %c1_18, %c8_19, %c0_20] : memref<1x2x16x256xf32, #tpu.memory_space<vmem>>, vector<1x1x5x192xf32>
    %16 = vector.shape_cast %15 : vector<1x1x5x192xf32> to vector<5x192xf32>
    %c0_21 = arith.constant 0 : index
    %c8_22 = arith.constant 8 : index
    %c256_23 = arith.constant 256 : index
    %17 = vector.load %arg3[%c0_21, %c8_22, %c256_23] : memref<1x13x448xf32, #tpu.memory_space<vmem>>, vector<1x5x192xf32>
    %18 = vector.shape_cast %17 : vector<1x5x192xf32> to vector<5x192xf32>
    %19 = vector.shape_cast %16 : vector<5x192xf32> to vector<1x5x192xf32>
    tpu.vector_store %arg3[%c0_21, %c8_22, %c256_23], %19 {strides = array<i32>} : memref<1x13x448xf32, #tpu.memory_space<vmem>>, vector<1x5x192xf32>,
    return
  }
  func.func @transform_0(%arg0: i32, %arg1: i32) -> (i32, i32, i32, i32) {
    %c0_i32 = arith.constant 0 : i32
    %c0_i32_0 = arith.constant 0 : i32
    %c0_i32_1 = arith.constant 0 : i32
    return %arg0, %arg1, %c0_i32, %c0_i32_0 : i32, i32, i32, i32
  }
  func.func @transform_1(%arg0: i32, %arg1: i32) -> (i32, i32, i32) {
    %c0_i32 = arith.constant 0 : i32
    %c0_i32_0 = arith.constant 0 : i32
    return %arg0, %arg1, %c0_i32 : i32, i32, i32
  }
}

</mosaic_0001>

<llo_original>
// kernel: window_unpartition.1
$region0: #{window_unpartition.1}
  #allocation0 [shape = 'u32[]', space=smem, size = 0x4, offset = 0x4, fixed_abs, tag = 'smem constant byte address 0x4 - core index']
  #allocation1 [shape = 'u32[144,128]{1,0:T(1,128)}', space=vmem, size = 0x12000, scoped, tag = 'internal scratch']
  %s0 = inlined_call_operand.vmem [shape: f32[2,2,16,256], index: 0, kind: input, shape index: {}]
  %s1 = inlined_call_operand.vmem [shape: f32[2,13,448], index: 1, kind: output, shape index: {}]
  %s2 = sld [smem:[#allocation0]]
  $region37: #{window_unpartition.1} parent=0
    _
  %s4 = ssub.s32 1, %s2
  %s5 = scalar_select 0, %s4, %s2
  loop: start=0, step=1, limit=4
  $region2: #{window_unpartition.1} parent=0 // loop_pre_header
    _
  $region3: #{window_unpartition.1} parent=0 // loop_header
    %s7 = sphi 0, %s11
    %p8 = scmp.ge.s32.totalorder %s7, 4
    %s14 = sphi 0, %s26
    %s15 = sphi 0, %s22
    %s16 = sphi 0, %s14
    %s17 = sphi 0, %s15
    %s18 = sphi 0, %s16
    %s19 = sphi 0, %s17
    %s31 = sphi 0, %s33
    %s34 = sphi 0, %s31
    %s35 = sphi 0, %s34
    %s51 = sphi 0, %s35
    %s59 = sphi 0, %s61
    %s62 = sphi 0, %s59
    %s63 = sphi 0, %s62
    %s79 = sphi 0, %s63
  $region4: #{window_unpartition.1} parent=0 // loop_header_branch
    %10 = sbr.rel (%p8) target = $region8
  $region5: #{window_unpartition.1} parent=0 // loop_body
    %s12 = ssub.s32 %s7, 1
    %s13 = ssub.s32 %s7, 2
    %s20 = sadd.s32 1, %s15
    %p21 = scmp.ge.s32.totalorder %s20, 1
    %s22 = scalar_select %p21, 0, %s20
    %s23 = sadd.s32 1, %s14
    %s24 = scalar_select %p21, %s23, %s14
    %p25 = scmp.ge.s32.totalorder %s24, 2
    %s26 = scalar_select %p25, 0, %s24
    %s27 = ssub.s32 %s14, %s26
    %s28 = ssub.s32 %s15, %s22
    %s29 = sor.u32 %s27, %s28
    %p30 = scmp.eq.s32.totalorder %s29, 0
    %s32 = sadd.s32 %s31, 1
    %s33 = scalar_select %p30, %s31, %s32
    %p36 = pneg %p30
    %p37 = scmp.eq.s32.totalorder %s7, 1
    %p38 = por %p36, %p37
    %p39 = scmp.ne.s32.totalorder %s31, %s34
    %p40 = scmp.eq.s32.totalorder %s7, 0
    %p41 = por %p39, %p40
    %p42 = scmp.ne.s32.totalorder %s31, %s34
    %p43 = scmp.eq.s32.totalorder %s12, 1
    %p44 = por %p42, %p43
    %p45 = scmp.ne.s32.totalorder %s34, %s35
    %p46 = scmp.eq.s32.totalorder %s12, 0
    %p47 = por %p45, %p46
    %p48 = scmp.ne.s32.totalorder %s34, %s35
    %p49 = scmp.eq.s32.totalorder %s13, 1
    %p50 = por %p48, %p49
    %p52 = scmp.ne.s32.totalorder %s35, %s51
    %p53 = scmp.eq.s32.totalorder %s13, 0
    %p54 = por %p52, %p53
    %s55 = ssub.s32 %s14, %s26
    %s56 = ssub.s32 %s15, %s22
    %s57 = sor.u32 %s55, %s56
    %p58 = scmp.eq.s32.totalorder %s57, 0
    %s60 = sadd.s32 %s59, 1
    %s61 = scalar_select %p58, %s59, %s60
    %p64 = pneg %p58
    %p65 = scmp.eq.s32.totalorder %s7, 1
    %p66 = por %p64, %p65
    %p67 = scmp.ne.s32.totalorder %s59, %s62
    %p68 = scmp.eq.s32.totalorder %s7, 0
    %p69 = por %p67, %p68
    %p70 = scmp.ne.s32.totalorder %s59, %s62
    %p71 = scmp.eq.s32.totalorder %s12, 1
    %p72 = por %p70, %p71
    %p73 = scmp.ne.s32.totalorder %s62, %s63
    %p74 = scmp.eq.s32.totalorder %s12, 0
    %p75 = por %p73, %p74
    %p76 = scmp.ne.s32.totalorder %s62, %s63
    %p77 = scmp.eq.s32.totalorder %s13, 1
    %p78 = por %p76, %p77
    %p80 = scmp.ne.s32.totalorder %s63, %s79
    %p81 = scmp.eq.s32.totalorder %s13, 0
    %p82 = por %p80, %p81
    %p83 = scmp.le.s32.totalorder 1, %s7
    %p84 = scmp.lt.s32.totalorder %s7, 3
    %p85 = pnand %p83, %p84
    %p86 = pneg %p85
    // Predicated region
    $region9: #{window_unpartition.1} parent=5 // pred_check
      _
    $region10: #{window_unpartition.1} parent=5 // pred_check_branch
      %88 = sbr.rel (%p85) target = $region12
    $region11: #{window_unpartition.1} parent=5 // pred_region
      %s89 = ssub.s32 %s7, 1
    $region12: #{window_unpartition.1} parent=5 // pred_fallthru
      _
    %p90 = scmp.lt.s32.totalorder %s7, 2
    // Predicated region
    $region13: #{window_unpartition.1} parent=5 // pred_check
      %p91 = pneg %p90
    $region14: #{window_unpartition.1} parent=5 // pred_check_branch
      %93 = sbr.rel (%p91) target = $region16
    $region15: #{window_unpartition.1} parent=5 // pred_region
      // Predicated region
      $region17: #{window_unpartition.1} parent=15 // pred_check
        %p94 = pneg %p41
      $region18: #{window_unpartition.1} parent=15 // pred_check_branch
        %96 = sbr.rel (%p94) target = $region20
      $region19: #{window_unpartition.1} parent=15 // pred_region
        %s97 = smul.u32 2, %s15
        %p98 = scmp.lt.s32.totalorder %s14, 1
        %s99 = scalar_select %p98, %s14, 1
        %p100 = scmp.lt.s32.totalorder %s97, 1
        %s101 = scalar_select %p100, %s97, 1
        %s102 = smul.addr %s101, 4
        %s103 = smul.addr %s99, 8
        %s104 = sadd.s32 %s102, %s103
        %s105 = smul.addr %s104, 8
        %s106 = scalar_lea.vmem %s0, %s105
        %s107 = smul.u32 2, %s15
      $region20: #{window_unpartition.1} parent=15 // pred_fallthru
        _
    $region16: #{window_unpartition.1} parent=5 // pred_fallthru
      _
    %p108 = scmp.le.s32.totalorder 1, %s7
    %p109 = scmp.lt.s32.totalorder %s7, 3
    %p110 = pnand %p108, %p109
    %p111 = pneg %p110
    // Predicated region
    $region21: #{window_unpartition.1} parent=5 // pred_check
      _
    $region22: #{window_unpartition.1} parent=5 // pred_check_branch
      %113 = sbr.rel (%p110) target = $region24
    $region23: #{window_unpartition.1} parent=5 // pred_region
      %s114 = ssub.s32 %s7, 1
      %s115 = smul.u32 2, %s17
      %p116 = scmp.lt.s32.totalorder %s16, 1
      %s117 = scalar_select %p116, %s16, 1
      %p118 = scmp.lt.s32.totalorder %s115, 1
      %s119 = scalar_select %p118, %s115, 1
      %s120 = smul.addr %s119, 4
      %s121 = smul.addr %s117, 8
      %s122 = sadd.s32 %s120, %s121
      %s123 = smul.addr %s122, 8
      %s124 = scalar_lea.vmem %s0, %s123
      %p125 = pneg %p47
      %p126 = pneg %p44
      %p127 = pneg %p75
      %p128 = pneg %p72
      %s129 = smul.u32 2, %s17
      %p130 = scmp.lt.s32.totalorder %s16, 1
      %s131 = scalar_select %p130, %s16, 1
      %p132 = scmp.lt.s32.totalorder %s129, 1
      %s133 = scalar_select %p132, %s129, 1
      %s134 = smul.addr %s133, 4
      %s135 = smul.addr %s131, 8
      %s136 = sadd.s32 %s134, %s135
      %s137 = smul.addr %s136, 8
      %s138 = scalar_lea.vmem %s1, %s137
      %s139 = smul.u32 2, %s17
      %p140 = scmp.lt.s32.totalorder %s16, 1
      %s141 = scalar_select %p140, %s16, 1
      %p142 = scmp.lt.s32.totalorder %s139, 1
      %s143 = scalar_select %p142, %s139, 1
      %s144 = smul.addr %s143, 4
      %s145 = smul.addr %s141, 8
      %s146 = sadd.s32 %s144, %s145
      %s147 = smul.addr %s146, 8
      %s148 = scalar_lea.vmem %s0, %s147
      %s149 = smul.u32 2, %s17
      %s150 = smul.u32 2, %s17
      %p151 = scmp.lt.s32.totalorder %s16, 1
      %s152 = scalar_select %p151, %s16, 1
      %p153 = scmp.lt.s32.totalorder %s150, 1
      %s154 = scalar_select %p153, %s150, 1
      %s155 = smul.addr %s154, 4
      %s156 = smul.addr %s152, 8
      %s157 = sadd.s32 %s155, %s156
      %s158 = smul.addr %s157, 8
      %s159 = scalar_lea.vmem %s1, %s158
      %s160 = smul.u32 2, %s17
      %v161 = vld [vmem:[%s148] sm:$0xff]
      %v162 = vld [vmem:[%s148 + $0x8] sm:$0xff]
      %163 = vst [vmem:[%s159] sm:$0xff] %v161
      %164 = vst [vmem:[%s159 + $0x8] sm:$0xff] %v162
      %v165 = vld [vmem:[%s148 + $0x10] sm:$0xff]
      %v166 = vld [vmem:[%s148 + $0x18] sm:$0xff]
      %167 = vst [vmem:[%s159 + $0x10] sm:$0xff] %v165
      %vm168 = vcmask 523264
      %169 = vst.msk [vmem:[%s159 + $0x18] sm:$0xff] %vm168, %v166
      %s170 = scalar_lea.vmem %s148, 32
      %v171 = vld [vmem:[%s170] sm:$0x1f]
      %v172 = vld [vmem:[%s170 + $0x8] sm:$0x1f]
      %173 = vst [vmem:[%s159 + $0x20] sm:$0x1f] %v171
      %174 = vst [vmem:[%s159 + $0x28] sm:$0x1f] %v172
      %v175 = vld [vmem:[%s170 + $0x10] sm:$0x1f]
      %v176 = vld [vmem:[%s170 + $0x18] sm:$0x1f]
      %177 = vst [vmem:[%s159 + $0x30] sm:$0x1f] %v175
      %vm178 = vcmask 520192
      %179 = vst.msk [vmem:[%s159 + $0x38] sm:$0x1f] %vm178, %v176
      %s180 = smul.u32 2, %s17
      %p181 = scmp.lt.s32.totalorder %s16, 1
      %s182 = scalar_select %p181, %s16, 1
      %p183 = scmp.lt.s32.totalorder %s180, 1
      %s184 = scalar_select %p183, %s180, 1
      %s185 = smul.addr %s184, 4
      %s186 = smul.addr %s182, 8
      %s187 = sadd.s32 %s185, %s186
      %s188 = smul.addr %s187, 8
      %s189 = scalar_lea.vmem %s1, %s188
      // Predicated region
      $region25: #{window_unpartition.1} parent=23 // pred_check
        %p190 = pneg %p72
      $region26: #{window_unpartition.1} parent=23 // pred_check_branch
        %192 = sbr.rel (%p190) target = $region28
      $region27: #{window_unpartition.1} parent=23 // pred_region
        %s193 = smul.u32 2, %s17
      $region28: #{window_unpartition.1} parent=23 // pred_fallthru
        _
    $region24: #{window_unpartition.1} parent=5 // pred_fallthru
      _
    %p194 = scmp.le.s32.totalorder 2, %s7
    // Predicated region
    $region29: #{window_unpartition.1} parent=5 // pred_check
      %p195 = pneg %p194
    $region30: #{window_unpartition.1} parent=5 // pred_check_branch
      %197 = sbr.rel (%p195) target = $region32
    $region31: #{window_unpartition.1} parent=5 // pred_region
      %s198 = ssub.s32 %s7, 2
      // Predicated region
      $region33: #{window_unpartition.1} parent=31 // pred_check
        %p199 = pneg %p78
      $region34: #{window_unpartition.1} parent=31 // pred_check_branch
        %201 = sbr.rel (%p199) target = $region36
      $region35: #{window_unpartition.1} parent=31 // pred_region
        %s202 = smul.u32 2, %s19
        %p203 = scmp.lt.s32.totalorder %s18, 1
        %s204 = scalar_select %p203, %s18, 1
        %p205 = scmp.lt.s32.totalorder %s202, 1
        %s206 = scalar_select %p205, %s202, 1
        %s207 = smul.addr %s206, 4
        %s208 = smul.addr %s204, 8
        %s209 = sadd.s32 %s207, %s208
        %s210 = smul.addr %s209, 8
        %s211 = scalar_lea.vmem %s1, %s210
      $region36: #{window_unpartition.1} parent=31 // pred_fallthru
        _
    $region32: #{window_unpartition.1} parent=5 // pred_fallthru
      _
  $region6: #{window_unpartition.1} parent=0 // loop_footer
    %s11 = sadd.s32 1, %s7
  $region7: #{window_unpartition.1} parent=0 // loop_footer_branch
    %6 = sbr.rel target = $region3
  $region8: #{window_unpartition.1} parent=0 // loop_exit
    _

</llo_original>
